<compile_context>
chip_gen: v7x
topology: tpu7x:2x2x1
jax: 0.10.0
libtpu: 0.0.40
codegen_flags: <defaults>
</compile_context>

<pallas_src>
import functools

import jax
import jax.numpy as jnp
from jax import lax
from jax.experimental import pallas as pl
from jax.experimental.pallas import tpu as pltpu


def _js_loss_kernel(x_ref, y_ref, part_ref, *, batch):
    i = pl.program_id(0)
    x = x_ref[...]                                   # (TB, C) f32 probability rows
    y = y_ref[...]
    tb = x.shape[0]

    # net = softmax((x + y)/2, axis=1), stable logsumexp form.
    avg = (x + y) * 0.5
    row_max = jnp.max(avg, axis=1, keepdims=True)    # (TB,1) lane reduce (XLU)
    shifted = avg - row_max
    exp_s = jnp.exp(shifted)                         # EUP
    denom = jnp.sum(exp_s, axis=1, keepdims=True)    # (TB,1) lane reduce
    log_denom = jnp.log(denom)                       # (TB,1) EUP

    # pointwise = m * (log m - 0.5*(log x + log y))      with m = exp_s / denom
    #           = exp_s * (shifted - log_denom - 0.5*log(x*y)) / denom
    # log(x*y) fuses two EUP logs into one; the /denom is factored into a
    # per-row reciprocal (TB values instead of TB*C) + broadcast multiply.
    t = exp_s * (shifted - log_denom - 0.5 * jnp.log(x * y))

    # Mask rows that are only batch padding (they were padded with 1.0).
    rows = i * tb + lax.broadcasted_iota(jnp.int32, (tb, 1), 0)
    scale = jnp.where(rows < batch, 1.0 / denom, 0.0)          # (TB,1)

    # Lane-dense per-block partial (1, C): cross-sublane reduce only; the
    # cross-lane reduce and the /batch divide happen once, outside the kernel.
    part_ref[...] = jnp.sum(t * scale, axis=0, keepdims=True)


def js_loss(inp, tgt, *, target_block_bytes=1 << 20):
    """Jensen-Shannon loss matching the PyTorch JSloss module ('batchmean')."""
    assert inp.ndim == 2 and inp.shape == tgt.shape
    b, c = inp.shape
    inp = inp.astype(jnp.float32)
    tgt = tgt.astype(jnp.float32)

    # Batch tile: multiple of 8 sublanes, ~target_block_bytes per input block,
    # but never larger than the (8-rounded) batch itself.
    b_ceil8 = ((b + 7) // 8) * 8
    tb = max(8, (target_block_bytes // (4 * c)) // 8 * 8)
    tb = min(tb, b_ceil8)
    num_blocks = (b + tb - 1) // tb
    b_pad = num_blocks * tb

    if b_pad != b:
        # Pad with 1.0 so log() stays finite; padded rows are masked in-kernel.
        pad = ((0, b_pad - b), (0, 0))
        inp = jnp.pad(inp, pad, constant_values=1.0)
        tgt = jnp.pad(tgt, pad, constant_values=1.0)

    block_bytes = tb * c * 4
    # 2 inputs x 2 pipeline buffers + headroom; capped so it also fits v7x.
    vmem_limit = min(64 << 20, max(16 << 20, 6 * block_bytes))

    partials = pl.pallas_call(
        functools.partial(_js_loss_kernel, batch=b),
        out_shape=jax.ShapeDtypeStruct((num_blocks, c), jnp.float32),
        grid=(num_blocks,),
        in_specs=[
            pl.BlockSpec((tb, c), lambda i: (i, 0)),
            pl.BlockSpec((tb, c), lambda i: (i, 0)),
        ],
        out_specs=pl.BlockSpec((1, c), lambda i: (i, 0)),
        compiler_params=pltpu.CompilerParams(
            dimension_semantics=("parallel",),   # independent blocks -> 2 TCs on v7x
            vmem_limit_bytes=vmem_limit,
        ),
    )(inp, tgt)

    return jnp.sum(partials) / b


def _js_loss_reference(inp, tgt):
    # Pure-JAX reference mirroring the PyTorch module.
    net = jax.nn.softmax((inp + tgt) / 2.0, axis=1)
    b = inp.shape[0]
    kl1 = jnp.sum(net * (jnp.log(net) - jnp.log(inp))) / b  # kl_div(inp.log(), net)
    kl2 = jnp.sum(net * (jnp.log(net) - jnp.log(tgt))) / b  # kl_div(tgt.log(), net)
    return 0.5 * (kl1 + kl2)


if __name__ == "__main__":
    B, C = 8, 128   # batch of 8 distributions over 128 classes (lane-dense)

    key = jax.random.PRNGKey(0)
    ki, kt = jax.random.split(key)
    # The module takes probability distributions (it calls input.log()), so
    # build strictly-positive normalized rows.
    inp = jax.nn.softmax(jax.random.normal(ki, (B, C), dtype=jnp.float32), axis=1)
    tgt = jax.nn.softmax(jax.random.normal(kt, (B, C), dtype=jnp.float32), axis=1)

    loss = jax.block_until_ready(js_loss(inp, tgt))
    ref = jax.block_until_ready(_js_loss_reference(inp, tgt))

    assert jnp.allclose(loss, ref, atol=1e-5, rtol=1e-5), (loss, ref)
    print("KERNEL_OK")
</pallas_src>

<mosaic_0001>
module attributes {stable_mosaic.version = 11 : i64} {
  func.func @_js_loss_kernel(%arg0: i32, %arg1: memref<8x128xf32, #tpu.memory_space<vmem>>, %arg2: memref<8x128xf32, #tpu.memory_space<vmem>>, %arg3: memref<1x128xf32, #tpu.memory_space<vmem>>) attributes {dimension_semantics = [#tpu.dimension_semantics<parallel>], iteration_bounds = array<i64: 1>, scalar_prefetch = 0 : i64, scratch_operands = 0 : i64, tpu.core_type = #tpu.core_type<tc>, window_params = [{transform_indices = @transform_0, window_bounds = array<i64: 8, 128>}, {transform_indices = @transform_1, window_bounds = array<i64: 8, 128>}, {transform_indices = @transform_2, window_bounds = array<i64: 1, 128>}]} {
    %c0 = arith.constant 0 : index
    %c0_0 = arith.constant 0 : index
    %0 = vector.load %arg1[%c0, %c0_0] : memref<8x128xf32, #tpu.memory_space<vmem>>, vector<8x128xf32>
    %c0_1 = arith.constant 0 : index
    %c0_2 = arith.constant 0 : index
    %1 = vector.load %arg2[%c0_1, %c0_2] : memref<8x128xf32, #tpu.memory_space<vmem>>, vector<8x128xf32>
    %2 = arith.addf %0, %1 : vector<8x128xf32>
    %cst = arith.constant 5.000000e-01 : f32
    %3 = vector.broadcast %cst : f32 to vector<8x128xf32>
    %4 = arith.mulf %2, %3 : vector<8x128xf32>
    %cst_3 = arith.constant dense<0xFF800000> : vector<8xf32>
    %5 = vector.multi_reduction <maximumf>, %4, %cst_3 [1] : vector<8x128xf32> to vector<8xf32>
    %6 = vector.shape_cast %5 : vector<8xf32> to vector<8x1xf32>
    %7 = vector.broadcast %6 : vector<8x1xf32> to vector<8x128xf32>
    %8 = arith.subf %4, %7 : vector<8x128xf32>
    %9 = math.exp %8 : vector<8x128xf32>
    %cst_4 = arith.constant dense<0.000000e+00> : vector<8xf32>
    %10 = vector.multi_reduction <add>, %9, %cst_4 [1] : vector<8x128xf32> to vector<8xf32>
    %11 = vector.shape_cast %10 : vector<8xf32> to vector<8x1xf32>
    %12 = math.log %11 : vector<8x1xf32>
    %13 = vector.broadcast %12 : vector<8x1xf32> to vector<8x128xf32>
    %14 = arith.subf %8, %13 : vector<8x128xf32>
    %15 = arith.mulf %0, %1 : vector<8x128xf32>
    %16 = math.log %15 : vector<8x128xf32>
    %cst_5 = arith.constant 5.000000e-01 : f32
    %17 = vector.broadcast %cst_5 : f32 to vector<8x128xf32>
    %18 = arith.mulf %17, %16 : vector<8x128xf32>
    %19 = arith.subf %14, %18 : vector<8x128xf32>
    %20 = arith.mulf %9, %19 : vector<8x128xf32>
    %c8_i32 = arith.constant 8 : i32
    %21 = arith.muli %arg0, %c8_i32 : i32
    %22 = tpu.iota {dimensions = array<i32: 0>} : vector<8x1xi32>
    %23 = vector.broadcast %21 : i32 to vector<8x1xi32>
    %24 = arith.addi %23, %22 : vector<8x1xi32>
    %c8_i32_6 = arith.constant 8 : i32
    %25 = vector.broadcast %c8_i32_6 : i32 to vector<8x1xi32>
    %26 = arith.cmpi slt, %24, %25 : vector<8x1xi32>
    %cst_7 = arith.constant 1.000000e+00 : f32
    %27 = vector.broadcast %cst_7 : f32 to vector<8x1xf32>
    %28 = arith.divf %27, %11 : vector<8x1xf32>
    %cst_8 = arith.constant 0.000000e+00 : f32
    %29 = vector.broadcast %cst_8 : f32 to vector<8x1xf32>
    %30 = arith.select %26, %28, %29 : vector<8x1xi1>, vector<8x1xf32>
    %31 = vector.broadcast %30 : vector<8x1xf32> to vector<8x128xf32>
    %32 = arith.mulf %20, %31 : vector<8x128xf32>
    %cst_9 = arith.constant dense<0.000000e+00> : vector<128xf32>
    %33 = vector.multi_reduction <add>, %32, %cst_9 [0] : vector<8x128xf32> to vector<128xf32>
    %34 = vector.shape_cast %33 : vector<128xf32> to vector<1x128xf32>
    %c0_10 = arith.constant 0 : index
    %c0_11 = arith.constant 0 : index
    %35 = vector.load %arg3[%c0_10, %c0_11] : memref<1x128xf32, #tpu.memory_space<vmem>>, vector<1x128xf32>
    tpu.vector_store %arg3[%c0_10, %c0_11], %34 {strides = array<i32>} : memref<1x128xf32, #tpu.memory_space<vmem>>, vector<1x128xf32>,
    return
  }
  func.func @transform_0(%arg0: i32) -> (i32, i32) {
    %c0_i32 = arith.constant 0 : i32
    %c0_i32_0 = arith.constant 0 : i32
    return %arg0, %c0_i32 : i32, i32
  }
  func.func @transform_1(%arg0: i32) -> (i32, i32) {
    %c0_i32 = arith.constant 0 : i32
    %c0_i32_0 = arith.constant 0 : i32
    return %arg0, %c0_i32 : i32, i32
  }
  func.func @transform_2(%arg0: i32) -> (i32, i32) {
    %c0_i32 = arith.constant 0 : i32
    %c0_i32_0 = arith.constant 0 : i32
    return %arg0, %c0_i32 : i32, i32
  }
}

</mosaic_0001>

<llo_original>
// kernel: tpu_custom_call.1
$region0: #{tpu_custom_call.1}
  #allocation0 [shape = 'u32[]', space=smem, size = 0x4, offset = 0x4, fixed_abs, tag = 'smem constant byte address 0x4 - core index']
  #allocation1 [shape = 'u32[144,128]{1,0:T(1,128)}', space=vmem, size = 0x12000, scoped, tag = 'internal scratch']
  %s0 = inlined_call_operand.hbm [shape: f32[8,128], index: 0, kind: input, shape index: {}]
  %s1 = inlined_call_operand.hbm [shape: f32[8,128], index: 1, kind: input, shape index: {}]
  %s2 = inlined_call_operand.hbm [shape: f32[1,128], index: 2, kind: output, shape index: {}]
  %s3 = sld [smem:[#allocation0]]
  $region26: #{tpu_custom_call.1} parent=0
    _
  %s5 = ssub.s32 1, %s3
  %s6 = scalar_select 0, %s5, %s3
  $region1: #{tpu_custom_call.1} parent=0
    #allocation2 [shape = 'u8[4096]{0}', space=vmem, size = 0x1000, scoped, tag = 'input window, operand 0, single buffered']
    #allocation3 [shape = 's32[1]{0}', space=sflag, size = 0x4, scoped, tag = 'scoped memory for tpu_custom_call.1']
    #allocation4 [shape = 's32[1]{0}', space=sflag, size = 0x4, scoped, tag = 'scoped memory for tpu_custom_call.1']
    #allocation5 [shape = 'u8[4096]{0}', space=vmem, size = 0x1000, scoped, tag = 'input window, operand 1, single buffered']
    #allocation6 [shape = 's32[1]{0}', space=sflag, size = 0x4, scoped, tag = 'scoped memory for tpu_custom_call.1']
    #allocation7 [shape = 'u8[512]{0}', space=vmem, size = 0x400, scoped, tag = 'output window, operand 0, single buffered']
    %7 = vsyncpa [#allocation3], 0
    %8 = vsyncpa [#allocation6], 0
    %9 = vsyncpa [#allocation4], 0
    // Predicated region
    $region2: #{tpu_custom_call.1} parent=1 // pred_check
      _
    $region3: #{tpu_custom_call.1} parent=1 // pred_check_branch
      %11 = sbr.rel (0) target = $region5
    $region4: #{tpu_custom_call.1} parent=1 // pred_region
      %s13 = ssub.s32 128, 128
      %14 = vsyncadd [#allocation3], %s13
      %s16 = sshll.u32 [#allocation2], 4
      %s17 = int_to_ptr.vmem [resolvable:$true] %s16
      %19 = dma.hbm_to_vmem [thread:$0]  %s0, 128, %s17, [#allocation3]
    $region5: #{tpu_custom_call.1} parent=1 // pred_fallthru
      _
    // Predicated region
    $region6: #{tpu_custom_call.1} parent=1 // pred_check
      _
    $region7: #{tpu_custom_call.1} parent=1 // pred_check_branch
      %21 = sbr.rel (0) target = $region9
    $region8: #{tpu_custom_call.1} parent=1 // pred_region
      %s23 = ssub.s32 128, 128
      %24 = vsyncadd [#allocation6], %s23
      %s26 = sshll.u32 [#allocation5], 4
      %s27 = int_to_ptr.vmem [resolvable:$true] %s26
      %29 = dma.hbm_to_vmem [thread:$0]  %s1, 128, %s27, [#allocation6]
    $region9: #{tpu_custom_call.1} parent=1 // pred_fallthru
      _
    // Predicated region
    $region10: #{tpu_custom_call.1} parent=1 // pred_check
      _
    $region11: #{tpu_custom_call.1} parent=1 // pred_check_branch
      %31 = sbr.rel (0) target = $region13
    $region12: #{tpu_custom_call.1} parent=1 // pred_region
      %32 = dma.done [#allocation3], 128
    $region13: #{tpu_custom_call.1} parent=1 // pred_fallthru
      _
    // Predicated region
    $region14: #{tpu_custom_call.1} parent=1 // pred_check
      _
    $region15: #{tpu_custom_call.1} parent=1 // pred_check_branch
      %34 = sbr.rel (0) target = $region17
    $region16: #{tpu_custom_call.1} parent=1 // pred_region
      %35 = dma.done [#allocation6], 128
    $region17: #{tpu_custom_call.1} parent=1 // pred_fallthru
      _
    %v36 = vld [vmem:[#allocation2] sm:$0xff]
    %v37 = vld [vmem:[#allocation5] sm:$0xff]
    %v38 = vadd.f32 %v36, %v37
    %v39 = vmul.f32 %v38, 0.5
    %40 = vmax.xlane.f32.xlu0 %v39
    %v41 = vpop.xlane.xlu0 %40
    %v42 = vsub.f32 %v39, %v41
    %v43 = vmul.f32 %v42, 1.442695
    %v44 = vpow.pop %v43
    %45 = vadd.xlane.f32.xlu0 %v44
    %v46 = vpop.xlane.xlu0 %45
    %v47 = vlog2.pop %v46
    %v48 = vmul.f32 %v47, 0.6931472
    %v49 = vsub.f32 %v42, %v48
    %v50 = vmul.f32 %v36, %v37
    %v51 = vlog2.pop %v50
    %v52 = vmul.f32 %v51, 0.6931472
    %v53 = vmul.f32 %v52, 0.5
    %v54 = vsub.f32 %v49, %v53
    %v55 = vmul.f32 %v44, %v54
    %s56 = smul.u32 0, 8
    %v57 = vlaneseq
    %v58 = vshrl.u32 %v57, 7
    %v59 = vstv %s56
    %v60 = vadd.s32 %v59, %v58
    %vm61 = vcmp.lt.s32.totalorder %v60, 8
    %v62 = vrcp.pop %v46
    %v63 = vmul.f32 1.0, %v62
    %v64 = vsel %vm61, %v63, 0.0
    %v65 = vmul.f32 %v55, %v64
    %v66 = vrot.slane %v65, 4
    %v67 = vadd.f32 %v65, %v66
    %v68 = vrot.slane %v67, 2
    %v69 = vadd.f32 %v67, %v68
    %v70 = vrot.slane %v69, 1
    %v71 = vadd.f32 %v69, %v70
    %72 = vst [vmem:[#allocation7] sm:$0x1] %v71
    // Predicated region
    $region18: #{tpu_custom_call.1} parent=1 // pred_check
      _
    $region19: #{tpu_custom_call.1} parent=1 // pred_check_branch
      %74 = sbr.rel (0) target = $region21
    $region20: #{tpu_custom_call.1} parent=1 // pred_region
      %s76 = ssub.s32 16, 16
      %77 = vsyncadd [#allocation4], %s76
      %s79 = sshll.u32 [#allocation7], 4
      %s80 = int_to_ptr.vmem [resolvable:$true] %s79
      %82 = dma.vmem_to_hbm [thread:$0]  %s80, 16, %s2, [#allocation4]
    $region21: #{tpu_custom_call.1} parent=1 // pred_fallthru
      _
    // Predicated region
    $region22: #{tpu_custom_call.1} parent=1 // pred_check
      _
    $region23: #{tpu_custom_call.1} parent=1 // pred_check_branch
      %84 = sbr.rel (0) target = $region25
    $region24: #{tpu_custom_call.1} parent=1 // pred_region
      %85 = dma.done [#allocation4], 16
    $region25: #{tpu_custom_call.1} parent=1 // pred_fallthru
      _
    %86 = vsyncpa [#allocation3], 1
    %87 = vsyncpa [#allocation6], 1
    %88 = vsyncpa [#allocation4], 1

</llo_original>
